<compile_context>
chip_gen: v6e
topology: v6e:2x2x1
jax: 0.10.0
libtpu: 0.0.40
codegen_flags: <defaults>
</compile_context>

<pallas_src>
import functools

import jax
import jax.numpy as jnp
from jax import lax
from jax.experimental import pallas as pl
from jax.experimental.pallas import tpu as pltpu


def _round_up(x, m):
    return (x + m - 1) // m * m


def _vq_kernel(x_ref, cb_ref, cb_hsq_ref, q_ref, idx_ref, sse_ref,
               *, n_valid, needs_row_mask):
    i = pl.program_id(0)
    tm = x_ref.shape[0]

    x = x_ref[...]                       # (tm, Dp)  input dtype
    cb = cb_ref[...]                     # (Kp, Dp)  codebook dtype
    cb_hsq = cb_hsq_ref[...]             # (1, Kp)   f32 = 0.5*||c||^2, padded rows huge

    # argmin_k ||x - c_k||^2  ==  argmin_k (0.5*||c_k||^2 - x.c_k)
    xc = lax.dot_general(
        x.astype(cb.dtype), cb,
        dimension_numbers=(((1,), (1,)), ((), ())),          # contract on D (MXU)
        preferred_element_type=jnp.float32)                  # (tm, Kp)
    dist = cb_hsq - xc                                        # (tm, Kp), VPU sub only

    idx = jnp.argmin(dist, axis=-1).astype(jnp.int32)         # (tm,)

    # One-hot gather of the selected codebook rows via a second MXU matmul
    # (exact: each output row is a copy of exactly one codebook row).
    onehot = (lax.broadcasted_iota(jnp.int32, dist.shape, 1) == idx[:, None])
    q = lax.dot_general(
        onehot.astype(cb.dtype), cb,
        dimension_numbers=(((1,), (0,)), ((), ())),
        preferred_element_type=jnp.float32)                   # (tm, Dp)

    q_ref[...] = q.astype(q_ref.dtype)
    idx_ref[...] = idx[None, :]                               # lane-dense (1, tm)

    # Per-block partial sum of squared error for the commitment loss.
    # Padded D columns are zero in both x and codebook -> contribute 0 automatically.
    err = (q - x.astype(jnp.float32)) ** 2                    # (tm, Dp)
    if needs_row_mask:
        rows = lax.broadcasted_iota(jnp.int32, (tm, 1), 0) + i * tm
        err = jnp.where(rows < n_valid, err, 0.0)
    sse_ref[...] = jnp.sum(err)[None, None, None]


def vq_quantize(x, codebook, *, commitment_weight=0.25, tm=512):
    """VQ forward: returns (x_quantized, indices, commit_loss)."""
    B, T, D = x.shape
    K, Dc = codebook.shape
    assert D == Dc
    N = B * T

    # Pad to TPU-friendly shapes: lanes (last dims) to 128, rows to the tile size.
    D_pad = _round_up(D, 128)
    K_pad = _round_up(K, 128)
    tm = _round_up(min(tm, _round_up(N, 128)), 128)
    N_pad = _round_up(N, tm)
    num_blocks = N_pad // tm

    x_flat = jnp.pad(x.reshape(N, D), ((0, N_pad - N), (0, D_pad - D)))
    cb_pad = jnp.pad(codebook, ((0, K_pad - K), (0, D_pad - D)))

    # Codebook-invariant work hoisted out of the kernel: 0.5*||c||^2 once, with a
    # huge bias on padded rows so they can never win the argmin.
    cb_hsq = 0.5 * jnp.sum(cb_pad.astype(jnp.float32) ** 2, axis=-1)
    cb_hsq = jnp.where(jnp.arange(K_pad) < K, cb_hsq, jnp.float32(1e30))[None, :]

    kernel = functools.partial(
        _vq_kernel, n_valid=N, needs_row_mask=(N_pad != N))

    q_flat, idx_out, sse = pl.pallas_call(
        kernel,
        out_shape=(
            jax.ShapeDtypeStruct((N_pad, D_pad), x.dtype),
            jax.ShapeDtypeStruct((1, N_pad), jnp.int32),
            jax.ShapeDtypeStruct((num_blocks, 1, 1), jnp.float32),
        ),
        grid_spec=pltpu.PrefetchScalarGridSpec(
            num_scalar_prefetch=0,
            grid=(num_blocks,),
            in_specs=[
                pl.BlockSpec((tm, D_pad), lambda i: (i, 0)),     # x tile
                pl.BlockSpec((K_pad, D_pad), lambda i: (0, 0)),  # codebook (fetched once)
                pl.BlockSpec((1, K_pad), lambda i: (0, 0)),      # 0.5*||c||^2 (fetched once)
            ],
            out_specs=[
                pl.BlockSpec((tm, D_pad), lambda i: (i, 0)),     # quantized tile
                pl.BlockSpec((1, tm), lambda i: (0, i)),         # lane-dense indices
                pl.BlockSpec((1, 1, 1), lambda i: (i, 0, 0)),    # per-block SSE partial
            ],
        ),
        compiler_params=pltpu.CompilerParams(
            dimension_semantics=("parallel",),
            vmem_limit_bytes=64 * 1024 * 1024,
        ),
    )(x_flat, cb_pad, cb_hsq)

    x_quantized = q_flat[:N, :D].reshape(B, T, D)
    indices = idx_out[0, :N].reshape(B, T)
    commit_loss = (jnp.sum(sse) / (N * D)) * jnp.float32(commitment_weight)
    return x_quantized, indices, commit_loss


if __name__ == "__main__":
    # Config implied by the module: n_embd (D), quantize_codebook_size (K),
    # quantize_commitment_weight.
    B, T, D, K = 2, 8, 32, 64
    commitment_weight = 0.25

    key = jax.random.PRNGKey(0)
    kx, kc = jax.random.split(key)
    x = jax.random.normal(kx, (B, T, D), dtype=jnp.float32)
    codebook = jax.random.normal(kc, (K, D), dtype=jnp.float32)

    x_q, indices, commit_loss = vq_quantize(
        x, codebook, commitment_weight=commitment_weight
    )
    jax.block_until_ready((x_q, indices, commit_loss))

    # Pure-JAX reference check.
    dist = (jnp.sum(x[..., None, :] ** 2, -1)
            - 2.0 * jnp.einsum("btd,kd->btk", x, codebook)
            + jnp.sum(codebook ** 2, -1))
    ref_idx = jnp.argmin(dist, axis=-1).astype(jnp.int32)
    ref_q = codebook[ref_idx]
    ref_loss = jnp.mean((ref_q - x) ** 2) * commitment_weight

    assert jnp.array_equal(indices, ref_idx)
    assert jnp.allclose(x_q, ref_q, atol=1e-5)
    assert jnp.allclose(commit_loss, ref_loss, atol=1e-5)

    print("KERNEL_OK")
</pallas_src>

<mosaic_0001>
module attributes {stable_mosaic.version = 11 : i64} {
  func.func @_vq_kernel(%arg0: i32, %arg1: memref<128x128xf32, #tpu.memory_space<vmem>>, %arg2: memref<128x128xf32, #tpu.memory_space<vmem>>, %arg3: memref<1x128xf32, #tpu.memory_space<vmem>>, %arg4: memref<128x128xf32, #tpu.memory_space<vmem>>, %arg5: memref<1x128xi32, #tpu.memory_space<vmem>>, %arg6: memref<1x1x1xf32, #tpu.memory_space<vmem>>) attributes {dimension_semantics = [#tpu.dimension_semantics<parallel>], iteration_bounds = array<i64: 1>, scalar_prefetch = 0 : i64, scratch_operands = 0 : i64, tpu.core_type = #tpu.core_type<tc>, window_params = [{transform_indices = @transform_0, window_bounds = array<i64: 128, 128>}, {pipeline_mode = #tpu.pipeline_mode<synchronous>, transform_indices = @transform_1, window_bounds = array<i64: 128, 128>}, {pipeline_mode = #tpu.pipeline_mode<synchronous>, transform_indices = @transform_2, window_bounds = array<i64: 1, 128>}, {transform_indices = @transform_3, window_bounds = array<i64: 128, 128>}, {transform_indices = @transform_4, window_bounds = array<i64: 1, 128>}, {transform_indices = @transform_5, window_bounds = array<i64: 1, 1, 1>}]} {
    %c0 = arith.constant 0 : index
    %c0_0 = arith.constant 0 : index
    %0 = vector.load %arg1[%c0, %c0_0] : memref<128x128xf32, #tpu.memory_space<vmem>>, vector<128x128xf32>
    %c0_1 = arith.constant 0 : index
    %c0_2 = arith.constant 0 : index
    %1 = vector.load %arg2[%c0_1, %c0_2] : memref<128x128xf32, #tpu.memory_space<vmem>>, vector<128x128xf32>
    %c0_3 = arith.constant 0 : index
    %c0_4 = arith.constant 0 : index
    %2 = vector.load %arg3[%c0_3, %c0_4] : memref<1x128xf32, #tpu.memory_space<vmem>>, vector<1x128xf32>
    %cst = arith.constant dense<0.000000e+00> : vector<128x128xf32>
    %3 = tpu.matmul %0, %1, %cst {dimension_numbers = #tpu.dot_dimension_numbers<[1], [1], [0], [0], [0, 0, 1, 0], [], []>} : vector<128x128xf32>, vector<128x128xf32>, vector<128x128xf32> -> vector<128x128xf32>
    %4 = vector.broadcast %2 : vector<1x128xf32> to vector<128x128xf32>
    %5 = arith.subf %4, %3 : vector<128x128xf32>
    %6 = tpu.reduce_index %5 {axis = 1 : i32, kind = #tpu.reduction_kind<arg_min>} : vector<128x128xf32> -> vector<128xi32>
    %7 = tpu.iota {dimensions = array<i32: 1>} : vector<128x128xi32>
    %8 = vector.shape_cast %6 : vector<128xi32> to vector<128x1xi32>
    %9 = vector.broadcast %8 : vector<128x1xi32> to vector<128x128xi32>
    %10 = arith.cmpi eq, %7, %9 : vector<128x128xi32>
    %11 = arith.extui %10 : vector<128x128xi1> to vector<128x128xi32>
    %12 = arith.sitofp %11 : vector<128x128xi32> to vector<128x128xf32>
    %cst_5 = arith.constant dense<0.000000e+00> : vector<128x128xf32>
    %13 = tpu.matmul %12, %1, %cst_5 {dimension_numbers = #tpu.dot_dimension_numbers<[1], [0], [0], [1], [0, 0, 1, 1], [], []>} : vector<128x128xf32>, vector<128x128xf32>, vector<128x128xf32> -> vector<128x128xf32>
    %c0_6 = arith.constant 0 : index
    %c0_7 = arith.constant 0 : index
    %14 = vector.load %arg4[%c0_6, %c0_7] : memref<128x128xf32, #tpu.memory_space<vmem>>, vector<128x128xf32>
    tpu.vector_store %arg4[%c0_6, %c0_7], %13 {strides = array<i32>} : memref<128x128xf32, #tpu.memory_space<vmem>>, vector<128x128xf32>,
    %15 = vector.shape_cast %6 : vector<128xi32> to vector<1x128xi32>
    %c0_8 = arith.constant 0 : index
    %c0_9 = arith.constant 0 : index
    %16 = vector.load %arg5[%c0_8, %c0_9] : memref<1x128xi32, #tpu.memory_space<vmem>>, vector<1x128xi32>
    tpu.vector_store %arg5[%c0_8, %c0_9], %15 {strides = array<i32>} : memref<1x128xi32, #tpu.memory_space<vmem>>, vector<1x128xi32>,
    %17 = arith.subf %13, %0 : vector<128x128xf32>
    %18 = arith.mulf %17, %17 : vector<128x128xf32>
    %19 = tpu.iota {dimensions = array<i32: 0>} : vector<128x1xi32>
    %c128_i32 = arith.constant 128 : i32
    %20 = arith.muli %arg0, %c128_i32 : i32
    %21 = vector.broadcast %20 : i32 to vector<128x1xi32>
    %22 = arith.addi %19, %21 : vector<128x1xi32>
    %c16_i32 = arith.constant 16 : i32
    %23 = vector.broadcast %c16_i32 : i32 to vector<128x1xi32>
    %24 = arith.cmpi slt, %22, %23 : vector<128x1xi32>
    %cst_10 = arith.constant 0.000000e+00 : f32
    %25 = vector.shape_cast %24 : vector<128x1xi1> to vector<128x1xi1>
    %26 = vector.broadcast %25 : vector<128x1xi1> to vector<128x128xi1>
    %27 = vector.broadcast %cst_10 : f32 to vector<128x128xf32>
    %28 = arith.select %26, %18, %27 : vector<128x128xi1>, vector<128x128xf32>
    %29 = vector.shape_cast %28 : vector<128x128xf32> to vector<1x128x128xf32>
    %cst_11 = arith.constant dense<0.000000e+00> : vector<1xf32>
    %30 = vector.multi_reduction <add>, %29, %cst_11 [1, 2] : vector<1x128x128xf32> to vector<1xf32>
    %31 = vector.shape_cast %30 : vector<1xf32> to vector<1x1x1xf32>
    %32 = vector.extract %31[0, 0, 0] : f32 from vector<1x1x1xf32>
    %33 = vector.broadcast %32 : f32 to vector<1x1x1xf32>
    %c0_12 = arith.constant 0 : index
    %c0_13 = arith.constant 0 : index
    %c0_14 = arith.constant 0 : index
    %34 = vector.load %arg6[%c0_12, %c0_13, %c0_14] : memref<1x1x1xf32, #tpu.memory_space<vmem>>, vector<1x1x1xf32>
    tpu.vector_store %arg6[%c0_12, %c0_13, %c0_14], %33 {strides = array<i32>} : memref<1x1x1xf32, #tpu.memory_space<vmem>>, vector<1x1x1xf32>,
    return
  }
  func.func @transform_0(%arg0: i32) -> (i32, i32) {
    %c0_i32 = arith.constant 0 : i32
    %c0_i32_0 = arith.constant 0 : i32
    return %arg0, %c0_i32 : i32, i32
  }
  func.func @transform_1(%arg0: i32) -> (i32, i32) {
    %c0_i32 = arith.constant 0 : i32
    %c0_i32_0 = arith.constant 0 : i32
    %c0_i32_1 = arith.constant 0 : i32
    return %c0_i32, %c0_i32_0 : i32, i32
  }
  func.func @transform_2(%arg0: i32) -> (i32, i32) {
    %c0_i32 = arith.constant 0 : i32
    %c0_i32_0 = arith.constant 0 : i32
    %c0_i32_1 = arith.constant 0 : i32
    return %c0_i32, %c0_i32_0 : i32, i32
  }
  func.func @transform_3(%arg0: i32) -> (i32, i32) {
    %c0_i32 = arith.constant 0 : i32
    %c0_i32_0 = arith.constant 0 : i32
    return %arg0, %c0_i32 : i32, i32
  }
  func.func @transform_4(%arg0: i32) -> (i32, i32) {
    %c0_i32 = arith.constant 0 : i32
    %c0_i32_0 = arith.constant 0 : i32
    return %c0_i32, %arg0 : i32, i32
  }
  func.func @transform_5(%arg0: i32) -> (i32, i32, i32) {
    %c0_i32 = arith.constant 0 : i32
    %c0_i32_0 = arith.constant 0 : i32
    %c0_i32_1 = arith.constant 0 : i32
    return %arg0, %c0_i32, %c0_i32_0 : i32, i32, i32
  }
}

</mosaic_0001>

<llo_original>
// kernel: tpu_custom_call.1
$region0: #{tpu_custom_call.1}
  #allocation0 [shape = 'u32[]', space=smem, size = 0x4, offset = 0x4, fixed_abs, tag = 'smem constant byte address 0x4 - core index']
  #allocation1 [shape = 'u32[144,128]{1,0:T(1,128)}', space=vmem, size = 0x12000, scoped, tag = 'internal scratch']
  %s0 = inlined_call_operand.hbm [shape: f32[128,128], index: 0, kind: input, shape index: {}]
  %s1 = inlined_call_operand.hbm [shape: f32[128,128], index: 1, kind: input, shape index: {}]
  %s2 = inlined_call_operand.vmem [shape: f32[1,128], index: 2, kind: input, shape index: {}]
  %s3 = inlined_call_operand.hbm [shape: f32[128,128], index: 3, kind: output, shape index: {0}]
  %s4 = inlined_call_operand.hbm [shape: s32[1,128], index: 4, kind: output, shape index: {1}]
  %s5 = inlined_call_operand.hbm [shape: f32[1,1,1], index: 5, kind: output, shape index: {2}]
  %6 = xla_tuple %s3, %s4, %s5
  %s7 = sld [smem:[#allocation0]]
  $region46: #{tpu_custom_call.1} parent=0
    _
  %s9 = ssub.s32 1, %s7
  %s10 = scalar_select 0, %s9, %s7
  $region1: #{tpu_custom_call.1} parent=0
    #allocation2 [shape = 'u8[65536]{0}', space=vmem, size = 0x10000, scoped, tag = 'input window, operand 0, single buffered']
    #allocation3 [shape = 's32[1]{0}', space=sflag, size = 0x4, scoped, tag = 'scoped memory for tpu_custom_call.1']
    #allocation4 [shape = 's32[1]{0}', space=sflag, size = 0x4, scoped, tag = 'scoped memory for tpu_custom_call.1']
    #allocation5 [shape = 'u8[65536]{0}', space=vmem, size = 0x10000, scoped, tag = 'input window, operand 1, single buffered']
    #allocation6 [shape = 's32[1]{0}', space=sflag, size = 0x4, scoped, tag = 'scoped memory for tpu_custom_call.1']
    #allocation7 [shape = 'u8[65536]{0}', space=vmem, size = 0x10000, scoped, tag = 'output window, operand 0, single buffered']
    #allocation8 [shape = 'u8[512]{0}', space=vmem, size = 0x400, scoped, tag = 'output window, operand 1, single buffered']
    #allocation9 [shape = 's32[1]{0}', space=sflag, size = 0x4, scoped, tag = 'scoped memory for tpu_custom_call.1']
    #allocation10 [shape = 'u8[512]{0}', space=vmem, size = 0x400, scoped, tag = 'output window, operand 2, single buffered']
    %11 = vsyncpa [#allocation3], 0
    %12 = vsyncpa [#allocation6], 0
    %13 = vsyncpa [#allocation4], 0
    %14 = vsyncpa [#allocation9], 0
    // Predicated region
    $region2: #{tpu_custom_call.1} parent=1 // pred_check
      _
    $region3: #{tpu_custom_call.1} parent=1 // pred_check_branch
      %16 = sbr.rel (0) target = $region5
    $region4: #{tpu_custom_call.1} parent=1 // pred_region
      %s18 = ssub.s32 2048, 2048
      %19 = vsyncadd [#allocation3], %s18
      %s20 = sshll.u32 [#allocation2], 4
      %s21 = int_to_ptr.vmem [resolvable:$true] %s20
      %26 = dma.hbm_to_vmem [thread:$0]  %s0, 2048, %s21, [#allocation3], 128, 128, 8
    $region5: #{tpu_custom_call.1} parent=1 // pred_fallthru
      _
    // Predicated region
    $region6: #{tpu_custom_call.1} parent=1 // pred_check
      _
    $region7: #{tpu_custom_call.1} parent=1 // pred_check_branch
      %28 = sbr.rel (0) target = $region9
    $region8: #{tpu_custom_call.1} parent=1 // pred_region
      %s30 = ssub.s32 2048, 2048
      %31 = vsyncadd [#allocation6], %s30
      %s32 = sshll.u32 [#allocation5], 4
      %s33 = int_to_ptr.vmem [resolvable:$true] %s32
      %38 = dma.hbm_to_vmem [thread:$0]  %s1, 2048, %s33, [#allocation6], 128, 128, 8
    $region9: #{tpu_custom_call.1} parent=1 // pred_fallthru
      _
    // Predicated region
    $region10: #{tpu_custom_call.1} parent=1 // pred_check
      _
    $region11: #{tpu_custom_call.1} parent=1 // pred_check_branch
      %40 = sbr.rel (0) target = $region13
    $region12: #{tpu_custom_call.1} parent=1 // pred_region
      _
    $region13: #{tpu_custom_call.1} parent=1 // pred_fallthru
      _
    // Predicated region
    $region14: #{tpu_custom_call.1} parent=1 // pred_check
      _
    $region15: #{tpu_custom_call.1} parent=1 // pred_check_branch
      %42 = sbr.rel (0) target = $region17
    $region16: #{tpu_custom_call.1} parent=1 // pred_region
      %43 = dma.done [#allocation3], 2048
    $region17: #{tpu_custom_call.1} parent=1 // pred_fallthru
      _
    // Predicated region
    $region18: #{tpu_custom_call.1} parent=1 // pred_check
      _
    $region19: #{tpu_custom_call.1} parent=1 // pred_check_branch
      %45 = sbr.rel (0) target = $region21
    $region20: #{tpu_custom_call.1} parent=1 // pred_region
      %46 = dma.done [#allocation6], 2048
    $region21: #{tpu_custom_call.1} parent=1 // pred_fallthru
      _
    %v47 = vld [vmem:[#allocation2] sm:$0xff]
    %v48 = vld [vmem:[#allocation2 + $0x8] sm:$0xff]
    %v49 = vld [vmem:[#allocation2 + $0x10] sm:$0xff]
    %v50 = vld [vmem:[#allocation2 + $0x18] sm:$0xff]
    %v51 = vld [vmem:[#allocation2 + $0x20] sm:$0xff]
    %v52 = vld [vmem:[#allocation2 + $0x28] sm:$0xff]
    %v53 = vld [vmem:[#allocation2 + $0x30] sm:$0xff]
    %v54 = vld [vmem:[#allocation2 + $0x38] sm:$0xff]
    %v55 = vld [vmem:[#allocation2 + $0x40] sm:$0xff]
    %v56 = vld [vmem:[#allocation2 + $0x48] sm:$0xff]
    %v57 = vld [vmem:[#allocation2 + $0x50] sm:$0xff]
    %v58 = vld [vmem:[#allocation2 + $0x58] sm:$0xff]
    %v59 = vld [vmem:[#allocation2 + $0x60] sm:$0xff]
    %v60 = vld [vmem:[#allocation2 + $0x68] sm:$0xff]
    %v61 = vld [vmem:[#allocation2 + $0x70] sm:$0xff]
    %v62 = vld [vmem:[#allocation2 + $0x78] sm:$0xff]
    %v63 = vld [vmem:[#allocation5] sm:$0xff]
    %v64 = vld [vmem:[#allocation5 + $0x8] sm:$0xff]
    %v65 = vld [vmem:[#allocation5 + $0x10] sm:$0xff]
    %v66 = vld [vmem:[#allocation5 + $0x18] sm:$0xff]
    %v67 = vld [vmem:[#allocation5 + $0x20] sm:$0xff]
    %v68 = vld [vmem:[#allocation5 + $0x28] sm:$0xff]
    %v69 = vld [vmem:[#allocation5 + $0x30] sm:$0xff]
    %v70 = vld [vmem:[#allocation5 + $0x38] sm:$0xff]
    %v71 = vld [vmem:[#allocation5 + $0x40] sm:$0xff]
    %v72 = vld [vmem:[#allocation5 + $0x48] sm:$0xff]
    %v73 = vld [vmem:[#allocation5 + $0x50] sm:$0xff]
    %v74 = vld [vmem:[#allocation5 + $0x58] sm:$0xff]
    %v75 = vld [vmem:[#allocation5 + $0x60] sm:$0xff]
    %v76 = vld [vmem:[#allocation5 + $0x68] sm:$0xff]
    %v77 = vld [vmem:[#allocation5 + $0x70] sm:$0xff]
    %v78 = vld [vmem:[#allocation5 + $0x78] sm:$0xff]
    %v79 = vld [vmem:[%s2] sm:$0x1]
    %80 = vmatprep.subr.mxu0 0.0
    %81 = vmatpush1.xpose.msra.mxu0 %v78
    %82 = vmatprep.subr.mxu0 0.0
    %83 = vmatpush1.xpose.msra.mxu0 %v77
    %84 = vmatprep.subr.mxu0 0.0
    %85 = vmatpush1.xpose.msra.mxu0 %v76
    %86 = vmatprep.subr.mxu0 0.0
    %87 = vmatpush1.xpose.msra.mxu0 %v75
    %88 = vmatprep.subr.mxu0 0.0
    %89 = vmatpush1.xpose.msra.mxu0 %v74
    %90 = vmatprep.subr.mxu0 0.0
    %91 = vmatpush1.xpose.msra.mxu0 %v73
    %92 = vmatprep.subr.mxu0 0.0
    %93 = vmatpush1.xpose.msra.mxu0 %v72
    %94 = vmatprep.subr.mxu0 0.0
    %95 = vmatpush1.xpose.msra.mxu0 %v71
    %96 = vmatprep.subr.mxu0 0.0
    %97 = vmatpush1.xpose.msra.mxu0 %v70
    %98 = vmatprep.subr.mxu0 0.0
    %99 = vmatpush1.xpose.msra.mxu0 %v69
    %100 = vmatprep.subr.mxu0 0.0
    %101 = vmatpush1.xpose.msra.mxu0 %v68
    %102 = vmatprep.subr.mxu0 0.0
    %103 = vmatpush1.xpose.msra.mxu0 %v67
    %104 = vmatprep.subr.mxu0 0.0
    %105 = vmatpush1.xpose.msra.mxu0 %v66
    %106 = vmatprep.subr.mxu0 0.0
    %107 = vmatpush1.xpose.msra.mxu0 %v65
    %108 = vmatprep.subr.mxu0 0.0
    %109 = vmatpush1.xpose.msra.mxu0 %v64
    %110 = vmatprep.subr.mxu0 0.0
    %111 = vmatpush1.xpose.msra.mxu0 %v63
    %112 = vmatprep.subr.mxu0 0.0
    %113 = vmatpush2.xpose.msra.mxu0 0.0
    %114 = vmatprep.subr.mxu0 0.0
    %115 = vmatpush2.xpose.msra.mxu0 0.0
    %116 = vmatprep.subr.mxu0 0.0
    %117 = vmatpush2.xpose.msra.mxu0 0.0
    %118 = vmatprep.subr.mxu0 0.0
    %119 = vmatpush2.xpose.msra.mxu0 0.0
    %120 = vmatprep.subr.mxu0 0.0
    %121 = vmatpush2.xpose.msra.mxu0 0.0
    %122 = vmatprep.subr.mxu0 0.0
    %123 = vmatpush2.xpose.msra.mxu0 0.0
    %124 = vmatprep.subr.mxu0 0.0
    %125 = vmatpush2.xpose.msra.mxu0 0.0
    %126 = vmatprep.subr.mxu0 0.0
    %127 = vmatpush2.xpose.msra.mxu0 0.0
    %128 = vmatprep.subr.mxu0 0.0
    %129 = vmatpush2.xpose.msra.mxu0 0.0
    %130 = vmatprep.subr.mxu0 0.0
    %131 = vmatpush2.xpose.msra.mxu0 0.0
    %132 = vmatprep.subr.mxu0 0.0
    %133 = vmatpush2.xpose.msra.mxu0 0.0
    %134 = vmatprep.subr.mxu0 0.0
    %135 = vmatpush2.xpose.msra.mxu0 0.0
    %136 = vmatprep.subr.mxu0 0.0
    %137 = vmatpush2.xpose.msra.mxu0 0.0
    %138 = vmatprep.subr.mxu0 0.0
    %139 = vmatpush2.xpose.msra.mxu0 0.0
    %140 = vmatprep.subr.mxu0 0.0
    %141 = vmatpush2.xpose.msra.mxu0 0.0
    %142 = vmatprep.subr.mxu0 0.0
    %143 = vmatpush2.xpose.msra.mxu0 0.0
    %144 = vmatprep.mubr.f32.mxu0 0.0
    %145 = vmatmul.mubr.f32.gmra.mxu0 %v47
    %v146 = vpop.f32.mrf.mxu0
    %v147 = vadd.f32 0.0, %v146
    %v148 = vpop.f32.mrf.mxu0
    %149 = vmatprep.mubr.f32.mxu0 0.0
    %150 = vmatmul.mubr.f32.gmra.mxu0 %v48
    %v151 = vpop.f32.mrf.mxu0
    %v152 = vadd.f32 0.0, %v151
    %v153 = vpop.f32.mrf.mxu0
    %154 = vmatprep.mubr.f32.mxu0 0.0
    %155 = vmatmul.mubr.f32.gmra.mxu0 %v49
    %v156 = vpop.f32.mrf.mxu0
    %v157 = vadd.f32 0.0, %v156
    %v158 = vpop.f32.mrf.mxu0
    %159 = vmatprep.mubr.f32.mxu0 0.0
    %160 = vmatmul.mubr.f32.gmra.mxu0 %v50
    %v161 = vpop.f32.mrf.mxu0
    %v162 = vadd.f32 0.0, %v161
    %v163 = vpop.f32.mrf.mxu0
    %164 = vmatprep.mubr.f32.mxu0 0.0
    %165 = vmatmul.mubr.f32.gmra.mxu0 %v51
    %v166 = vpop.f32.mrf.mxu0
    %v167 = vadd.f32 0.0, %v166
    %v168 = vpop.f32.mrf.mxu0
    %169 = vmatprep.mubr.f32.mxu0 0.0
    %170 = vmatmul.mubr.f32.gmra.mxu0 %v52
    %v171 = vpop.f32.mrf.mxu0
    %v172 = vadd.f32 0.0, %v171
    %v173 = vpop.f32.mrf.mxu0
    %174 = vmatprep.mubr.f32.mxu0 0.0
    %175 = vmatmul.mubr.f32.gmra.mxu0 %v53
    %v176 = vpop.f32.mrf.mxu0
    %v177 = vadd.f32 0.0, %v176
    %v178 = vpop.f32.mrf.mxu0
    %179 = vmatprep.mubr.f32.mxu0 0.0
    %180 = vmatmul.mubr.f32.gmra.mxu0 %v54
    %v181 = vpop.f32.mrf.mxu0
    %v182 = vadd.f32 0.0, %v181
    %v183 = vpop.f32.mrf.mxu0
    %184 = vmatprep.mubr.f32.mxu0 0.0
    %185 = vmatmul.mubr.f32.gmra.mxu0 %v55
    %v186 = vpop.f32.mrf.mxu0
    %v187 = vadd.f32 0.0, %v186
    %v188 = vpop.f32.mrf.mxu0
    %189 = vmatprep.mubr.f32.mxu0 0.0
    %190 = vmatmul.mubr.f32.gmra.mxu0 %v56
    %v191 = vpop.f32.mrf.mxu0
    %v192 = vadd.f32 0.0, %v191
    %v193 = vpop.f32.mrf.mxu0
    %194 = vmatprep.mubr.f32.mxu0 0.0
    %195 = vmatmul.mubr.f32.gmra.mxu0 %v57
    %v196 = vpop.f32.mrf.mxu0
    %v197 = vadd.f32 0.0, %v196
    %v198 = vpop.f32.mrf.mxu0
    %199 = vmatprep.mubr.f32.mxu0 0.0
    %200 = vmatmul.mubr.f32.gmra.mxu0 %v58
    %v201 = vpop.f32.mrf.mxu0
    %v202 = vadd.f32 0.0, %v201
    %v203 = vpop.f32.mrf.mxu0
    %204 = vmatprep.mubr.f32.mxu0 0.0
    %205 = vmatmul.mubr.f32.gmra.mxu0 %v59
    %v206 = vpop.f32.mrf.mxu0
    %v207 = vadd.f32 0.0, %v206
    %v208 = vpop.f32.mrf.mxu0
    %209 = vmatprep.mubr.f32.mxu0 0.0
    %210 = vmatmul.mubr.f32.gmra.mxu0 %v60
    %v211 = vpop.f32.mrf.mxu0
    %v212 = vadd.f32 0.0, %v211
    %v213 = vpop.f32.mrf.mxu0
    %214 = vmatprep.mubr.f32.mxu0 0.0
    %215 = vmatmul.mubr.f32.gmra.mxu0 %v61
    %v216 = vpop.f32.mrf.mxu0
    %v217 = vadd.f32 0.0, %v216
    %v218 = vpop.f32.mrf.mxu0
    %219 = vmatprep.mubr.f32.mxu0 0.0
    %220 = vmatmul.mubr.f32.gmra.mxu0 %v62
    %v221 = vpop.f32.mrf.mxu0
    %v222 = vadd.f32 0.0, %v221
    %v223 = vpop.f32.mrf.mxu0
    %224 = vdwg.mxu0
    %v226 = vlaneseq
    %v227 = vshrl.u32 %v226, 7
    %v228 = vsub.s32 0, %v227
    %v229 = vrot.slane %v79, %v228
    %v231 = vsub.f32 %v229, %v147
    %v232 = vsub.f32 %v229, %v152
    %v233 = vsub.f32 %v229, %v157
    %v234 = vsub.f32 %v229, %v162
    %v235 = vsub.f32 %v229, %v167
    %v236 = vsub.f32 %v229, %v172
    %v237 = vsub.f32 %v229, %v177
    %v238 = vsub.f32 %v229, %v182
    %v239 = vsub.f32 %v229, %v187
    %v240 = vsub.f32 %v229, %v192
    %v241 = vsub.f32 %v229, %v197
    %v242 = vsub.f32 %v229, %v202
    %v243 = vsub.f32 %v229, %v207
    %v244 = vsub.f32 %v229, %v212
    %v245 = vsub.f32 %v229, %v217
    %v246 = vsub.f32 %v229, %v222
    %247 = vmin.index.xlane.f32.xlu0 %v231
    %v248 = vpop.xlane.xlu0 %247
    %249 = vmin.index.xlane.f32.xlu0 %v232
    %v250 = vpop.xlane.xlu0 %249
    %251 = vmin.index.xlane.f32.xlu0 %v233
    %v252 = vpop.xlane.xlu0 %251
    %253 = vmin.index.xlane.f32.xlu0 %v234
    %v254 = vpop.xlane.xlu0 %253
    %255 = vmin.index.xlane.f32.xlu0 %v235
    %v256 = vpop.xlane.xlu0 %255
    %257 = vmin.index.xlane.f32.xlu0 %v236
    %v258 = vpop.xlane.xlu0 %257
    %259 = vmin.index.xlane.f32.xlu0 %v237
    %v260 = vpop.xlane.xlu0 %259
    %261 = vmin.index.xlane.f32.xlu0 %v238
    %v262 = vpop.xlane.xlu0 %261
    %263 = vmin.index.xlane.f32.xlu0 %v239
    %v264 = vpop.xlane.xlu0 %263
    %265 = vmin.index.xlane.f32.xlu0 %v240
    %v266 = vpop.xlane.xlu0 %265
    %267 = vmin.index.xlane.f32.xlu0 %v241
    %v268 = vpop.xlane.xlu0 %267
    %269 = vmin.index.xlane.f32.xlu0 %v242
    %v270 = vpop.xlane.xlu0 %269
    %271 = vmin.index.xlane.f32.xlu0 %v243
    %v272 = vpop.xlane.xlu0 %271
    %273 = vmin.index.xlane.f32.xlu0 %v244
    %v274 = vpop.xlane.xlu0 %273
    %275 = vmin.index.xlane.f32.xlu0 %v245
    %v276 = vpop.xlane.xlu0 %275
    %277 = vmin.index.xlane.f32.xlu0 %v246
    %v278 = vpop.xlane.xlu0 %277
    %v279 = vlaneseq
    %v280 = vand.u32 %v279, 127
    %vm281 = vcmp.eq.s32.totalorder %v280, %v248
    %vm282 = vcmp.eq.s32.totalorder %v280, %v250
    %vm283 = vcmp.eq.s32.totalorder %v280, %v252
    %vm284 = vcmp.eq.s32.totalorder %v280, %v254
    %vm285 = vcmp.eq.s32.totalorder %v280, %v256
    %vm286 = vcmp.eq.s32.totalorder %v280, %v258
    %vm287 = vcmp.eq.s32.totalorder %v280, %v260
    %vm288 = vcmp.eq.s32.totalorder %v280, %v262
    %vm289 = vcmp.eq.s32.totalorder %v280, %v264
    %vm290 = vcmp.eq.s32.totalorder %v280, %v266
    %vm291 = vcmp.eq.s32.totalorder %v280, %v268
    %vm292 = vcmp.eq.s32.totalorder %v280, %v270
    %vm293 = vcmp.eq.s32.totalorder %v280, %v272
    %vm294 = vcmp.eq.s32.totalorder %v280, %v274
    %vm295 = vcmp.eq.s32.totalorder %v280, %v276
    %vm296 = vcmp.eq.s32.totalorder %v280, %v278
    %v297 = vsel %vm281, 1, 0
    %v298 = vsel %vm282, 1, 0
    %v299 = vsel %vm283, 1, 0
    %v300 = vsel %vm284, 1, 0
    %v301 = vsel %vm285, 1, 0
    %v302 = vsel %vm286, 1, 0
    %v303 = vsel %vm287, 1, 0
    %v304 = vsel %vm288, 1, 0
    %v305 = vsel %vm289, 1, 0
    %v306 = vsel %vm290, 1, 0
    %v307 = vsel %vm291, 1, 0
    %v308 = vsel %vm292, 1, 0
    %v309 = vsel %vm293, 1, 0
    %v310 = vsel %vm294, 1, 0
    %v311 = vsel %vm295, 1, 0
    %v312 = vsel %vm296, 1, 0
    %v313 = vcvt.s32.f32 %v297
    %v314 = vcvt.s32.f32 %v298
    %v315 = vcvt.s32.f32 %v299
    %v316 = vcvt.s32.f32 %v300
    %v317 = vcvt.s32.f32 %v301
    %v318 = vcvt.s32.f32 %v302
    %v319 = vcvt.s32.f32 %v303
    %v320 = vcvt.s32.f32 %v304
    %v321 = vcvt.s32.f32 %v305
    %v322 = vcvt.s32.f32 %v306
    %v323 = vcvt.s32.f32 %v307
    %v324 = vcvt.s32.f32 %v308
    %v325 = vcvt.s32.f32 %v309
    %v326 = vcvt.s32.f32 %v310
    %v327 = vcvt.s32.f32 %v311
    %v328 = vcvt.s32.f32 %v312
    %329 = vmatprep.subr.mxu0 0.0
    %330 = vmatpush1.msra.mxu0 %v78
    %331 = vmatprep.subr.mxu0 0.0
    %332 = vmatpush1.msra.mxu0 %v77
    %333 = vmatprep.subr.mxu0 0.0
    %334 = vmatpush1.msra.mxu0 %v76
    %335 = vmatprep.subr.mxu0 0.0
    %336 = vmatpush1.msra.mxu0 %v75
    %337 = vmatprep.subr.mxu0 0.0
    %338 = vmatpush1.msra.mxu0 %v74
    %339 = vmatprep.subr.mxu0 0.0
    %340 = vmatpush1.msra.mxu0 %v73
    %341 = vmatprep.subr.mxu0 0.0
    %342 = vmatpush1.msra.mxu0 %v72
    %343 = vmatprep.subr.mxu0 0.0
    %344 = vmatpush1.msra.mxu0 %v71
    %345 = vmatprep.subr.mxu0 0.0
    %346 = vmatpush1.msra.mxu0 %v70
    %347 = vmatprep.subr.mxu0 0.0
    %348 = vmatpush1.msra.mxu0 %v69
    %349 = vmatprep.subr.mxu0 0.0
    %350 = vmatpush1.msra.mxu0 %v68
    %351 = vmatprep.subr.mxu0 0.0
    %352 = vmatpush1.msra.mxu0 %v67
    %353 = vmatprep.subr.mxu0 0.0
    %354 = vmatpush1.msra.mxu0 %v66
    %355 = vmatprep.subr.mxu0 0.0
    %356 = vmatpush1.msra.mxu0 %v65
    %357 = vmatprep.subr.mxu0 0.0
    %358 = vmatpush1.msra.mxu0 %v64
    %359 = vmatprep.subr.mxu0 0.0
    %360 = vmatpush1.msra.mxu0 %v63
    %361 = vmatprep.subr.mxu0 0.0
    %362 = vmatpush2.msra.mxu0 0.0
    %363 = vmatprep.subr.mxu0 0.0
    %364 = vmatpush2.msra.mxu0 0.0
    %365 = vmatprep.subr.mxu0 0.0
    %366 = vmatpush2.msra.mxu0 0.0
    %367 = vmatprep.subr.mxu0 0.0
    %368 = vmatpush2.msra.mxu0 0.0
    %369 = vmatprep.subr.mxu0 0.0
    %370 = vmatpush2.msra.mxu0 0.0
    %371 = vmatprep.subr.mxu0 0.0
    %372 = vmatpush2.msra.mxu0 0.0
    %373 = vmatprep.subr.mxu0 0.0
    %374 = vmatpush2.msra.mxu0 0.0
    %375 = vmatprep.subr.mxu0 0.0
    %376 = vmatpush2.msra.mxu0 0.0
    %377 = vmatprep.subr.mxu0 0.0
    %378 = vmatpush2.msra.mxu0 0.0
    %379 = vmatprep.subr.mxu0 0.0
    %380 = vmatpush2.msra.mxu0 0.0
    %381 = vmatprep.subr.mxu0 0.0
    %382 = vmatpush2.msra.mxu0 0.0
    %383 = vmatprep.subr.mxu0 0.0
    %384 = vmatpush2.msra.mxu0 0.0
    %385 = vmatprep.subr.mxu0 0.0
    %386 = vmatpush2.msra.mxu0 0.0
    %387 = vmatprep.subr.mxu0 0.0
    %388 = vmatpush2.msra.mxu0 0.0
    %389 = vmatprep.subr.mxu0 0.0
    %390 = vmatpush2.msra.mxu0 0.0
    %391 = vmatprep.subr.mxu0 0.0
    %392 = vmatpush2.msra.mxu0 0.0
    %393 = vmatprep.mubr.f32.mxu0 0.0
    %394 = vmatmul.mubr.f32.gmra.mxu0 %v313
    %v395 = vpop.f32.mrf.mxu0
    %v396 = vadd.f32 0.0, %v395
    %v397 = vpop.f32.mrf.mxu0
    %398 = vmatprep.mubr.f32.mxu0 0.0
    %399 = vmatmul.mubr.f32.gmra.mxu0 %v314
    %v400 = vpop.f32.mrf.mxu0
    %v401 = vadd.f32 0.0, %v400
    %v402 = vpop.f32.mrf.mxu0
    %403 = vmatprep.mubr.f32.mxu0 0.0
    %404 = vmatmul.mubr.f32.gmra.mxu0 %v315
    %v405 = vpop.f32.mrf.mxu0
    %v406 = vadd.f32 0.0, %v405
    %v407 = vpop.f32.mrf.mxu0
    %408 = vmatprep.mubr.f32.mxu0 0.0
    %409 = vmatmul.mubr.f32.gmra.mxu0 %v316
    %v410 = vpop.f32.mrf.mxu0
    %v411 = vadd.f32 0.0, %v410
    %v412 = vpop.f32.mrf.mxu0
    %413 = vmatprep.mubr.f32.mxu0 0.0
    %414 = vmatmul.mubr.f32.gmra.mxu0 %v317
    %v415 = vpop.f32.mrf.mxu0
    %v416 = vadd.f32 0.0, %v415
    %v417 = vpop.f32.mrf.mxu0
    %418 = vmatprep.mubr.f32.mxu0 0.0
    %419 = vmatmul.mubr.f32.gmra.mxu0 %v318
    %v420 = vpop.f32.mrf.mxu0
    %v421 = vadd.f32 0.0, %v420
    %v422 = vpop.f32.mrf.mxu0
    %423 = vmatprep.mubr.f32.mxu0 0.0
    %424 = vmatmul.mubr.f32.gmra.mxu0 %v319
    %v425 = vpop.f32.mrf.mxu0
    %v426 = vadd.f32 0.0, %v425
    %v427 = vpop.f32.mrf.mxu0
    %428 = vmatprep.mubr.f32.mxu0 0.0
    %429 = vmatmul.mubr.f32.gmra.mxu0 %v320
    %v430 = vpop.f32.mrf.mxu0
    %v431 = vadd.f32 0.0, %v430
    %v432 = vpop.f32.mrf.mxu0
    %433 = vmatprep.mubr.f32.mxu0 0.0
    %434 = vmatmul.mubr.f32.gmra.mxu0 %v321
    %v435 = vpop.f32.mrf.mxu0
    %v436 = vadd.f32 0.0, %v435
    %v437 = vpop.f32.mrf.mxu0
    %438 = vmatprep.mubr.f32.mxu0 0.0
    %439 = vmatmul.mubr.f32.gmra.mxu0 %v322
    %v440 = vpop.f32.mrf.mxu0
    %v441 = vadd.f32 0.0, %v440
    %v442 = vpop.f32.mrf.mxu0
    %443 = vmatprep.mubr.f32.mxu0 0.0
    %444 = vmatmul.mubr.f32.gmra.mxu0 %v323
    %v445 = vpop.f32.mrf.mxu0
    %v446 = vadd.f32 0.0, %v445
    %v447 = vpop.f32.mrf.mxu0
    %448 = vmatprep.mubr.f32.mxu0 0.0
    %449 = vmatmul.mubr.f32.gmra.mxu0 %v324
    %v450 = vpop.f32.mrf.mxu0
    %v451 = vadd.f32 0.0, %v450
    %v452 = vpop.f32.mrf.mxu0
    %453 = vmatprep.mubr.f32.mxu0 0.0
    %454 = vmatmul.mubr.f32.gmra.mxu0 %v325
    %v455 = vpop.f32.mrf.mxu0
    %v456 = vadd.f32 0.0, %v455
    %v457 = vpop.f32.mrf.mxu0
    %458 = vmatprep.mubr.f32.mxu0 0.0
    %459 = vmatmul.mubr.f32.gmra.mxu0 %v326
    %v460 = vpop.f32.mrf.mxu0
    %v461 = vadd.f32 0.0, %v460
    %v462 = vpop.f32.mrf.mxu0
    %463 = vmatprep.mubr.f32.mxu0 0.0
    %464 = vmatmul.mubr.f32.gmra.mxu0 %v327
    %v465 = vpop.f32.mrf.mxu0
    %v466 = vadd.f32 0.0, %v465
    %v467 = vpop.f32.mrf.mxu0
    %468 = vmatprep.mubr.f32.mxu0 0.0
    %469 = vmatmul.mubr.f32.gmra.mxu0 %v328
    %v470 = vpop.f32.mrf.mxu0
    %v471 = vadd.f32 0.0, %v470
    %v472 = vpop.f32.mrf.mxu0
    %473 = vdwg.mxu0
    %474 = vst [vmem:[#allocation7] sm:$0xff] %v396
    %475 = vst [vmem:[#allocation7 + $0x8] sm:$0xff] %v401
    %476 = vst [vmem:[#allocation7 + $0x10] sm:$0xff] %v406
    %477 = vst [vmem:[#allocation7 + $0x18] sm:$0xff] %v411
    %478 = vst [vmem:[#allocation7 + $0x20] sm:$0xff] %v416
    %479 = vst [vmem:[#allocation7 + $0x28] sm:$0xff] %v421
    %480 = vst [vmem:[#allocation7 + $0x30] sm:$0xff] %v426
    %481 = vst [vmem:[#allocation7 + $0x38] sm:$0xff] %v431
    %482 = vst [vmem:[#allocation7 + $0x40] sm:$0xff] %v436
    %483 = vst [vmem:[#allocation7 + $0x48] sm:$0xff] %v441
    %484 = vst [vmem:[#allocation7 + $0x50] sm:$0xff] %v446
    %485 = vst [vmem:[#allocation7 + $0x58] sm:$0xff] %v451
    %486 = vst [vmem:[#allocation7 + $0x60] sm:$0xff] %v456
    %487 = vst [vmem:[#allocation7 + $0x68] sm:$0xff] %v461
    %488 = vst [vmem:[#allocation7 + $0x70] sm:$0xff] %v466
    %489 = vst [vmem:[#allocation7 + $0x78] sm:$0xff] %v471
    %v490 = vlaneseq
    %v491 = vshrl.u32 %v490, 7
    %v492 = vsub.s32 %v280, %v491
    %v493 = vrot.slane %v248, %v492
    %v494 = vadd.s32 %v280, 4294967288
    %v495 = vlaneseq
    %v496 = vshrl.u32 %v495, 7
    %v497 = vsub.s32 %v494, %v496
    %v498 = vrot.slane %v250, %v497
    %vm499 = vcmask 130112
    %v500 = vsel %vm499, %v498, %v493
    %v501 = vadd.s32 %v280, 4294967280
    %v502 = vlaneseq
    %v503 = vshrl.u32 %v502, 7
    %v504 = vsub.s32 %v501, %v503
    %v505 = vrot.slane %v252, %v504
    %vm506 = vcmask 195712
    %v507 = vsel %vm506, %v505, %v500
    %v508 = vadd.s32 %v280, 4294967272
    %v509 = vlaneseq
    %v510 = vshrl.u32 %v509, 7
    %v511 = vsub.s32 %v508, %v510
    %v512 = vrot.slane %v254, %v511
    %vm513 = vcmask 261312
    %v514 = vsel %vm513, %v512, %v507
    %v515 = vadd.s32 %v280, 4294967264
    %v516 = vlaneseq
    %v517 = vshrl.u32 %v516, 7
    %v518 = vsub.s32 %v515, %v517
    %v519 = vrot.slane %v256, %v518
    %vm520 = vcmask 326912
    %v521 = vsel %vm520, %v519, %v514
    %v522 = vadd.s32 %v280, 4294967256
    %v523 = vlaneseq
    %v524 = vshrl.u32 %v523, 7
    %v525 = vsub.s32 %v522, %v524
    %v526 = vrot.slane %v258, %v525
    %vm527 = vcmask 392512
    %v528 = vsel %vm527, %v526, %v521
    %v529 = vadd.s32 %v280, 4294967248
    %v530 = vlaneseq
    %v531 = vshrl.u32 %v530, 7
    %v532 = vsub.s32 %v529, %v531
    %v533 = vrot.slane %v260, %v532
    %vm534 = vcmask 458112
    %v535 = vsel %vm534, %v533, %v528
    %v536 = vadd.s32 %v280, 4294967240
    %v537 = vlaneseq
    %v538 = vshrl.u32 %v537, 7
    %v539 = vsub.s32 %v536, %v538
    %v540 = vrot.slane %v262, %v539
    %vm541 = vcmask 523712
    %v542 = vsel %vm541, %v540, %v535
    %v543 = vadd.s32 %v280, 4294967232
    %v544 = vlaneseq
    %v545 = vshrl.u32 %v544, 7
    %v546 = vsub.s32 %v543, %v545
    %v547 = vrot.slane %v264, %v546
    %vm548 = vcmask 589312
    %v549 = vsel %vm548, %v547, %v542
    %v550 = vadd.s32 %v280, 4294967224
    %v551 = vlaneseq
    %v552 = vshrl.u32 %v551, 7
    %v553 = vsub.s32 %v550, %v552
    %v554 = vrot.slane %v266, %v553
    %vm555 = vcmask 654912
    %v556 = vsel %vm555, %v554, %v549
    %v557 = vadd.s32 %v280, 4294967216
    %v558 = vlaneseq
    %v559 = vshrl.u32 %v558, 7
    %v560 = vsub.s32 %v557, %v559
    %v561 = vrot.slane %v268, %v560
    %vm562 = vcmask 720512
    %v563 = vsel %vm562, %v561, %v556
    %v564 = vadd.s32 %v280, 4294967208
    %v565 = vlaneseq
    %v566 = vshrl.u32 %v565, 7
    %v567 = vsub.s32 %v564, %v566
    %v568 = vrot.slane %v270, %v567
    %vm569 = vcmask 786112
    %v570 = vsel %vm569, %v568, %v563
    %v571 = vadd.s32 %v280, 4294967200
    %v572 = vlaneseq
    %v573 = vshrl.u32 %v572, 7
    %v574 = vsub.s32 %v571, %v573
    %v575 = vrot.slane %v272, %v574
    %vm576 = vcmask 851712
    %v577 = vsel %vm576, %v575, %v570
    %v578 = vadd.s32 %v280, 4294967192
    %v579 = vlaneseq
    %v580 = vshrl.u32 %v579, 7
    %v581 = vsub.s32 %v578, %v580
    %v582 = vrot.slane %v274, %v581
    %vm583 = vcmask 917312
    %v584 = vsel %vm583, %v582, %v577
    %v585 = vadd.s32 %v280, 4294967184
    %v586 = vlaneseq
    %v587 = vshrl.u32 %v586, 7
    %v588 = vsub.s32 %v585, %v587
    %v589 = vrot.slane %v276, %v588
    %vm590 = vcmask 982912
    %v591 = vsel %vm590, %v589, %v584
    %v592 = vadd.s32 %v280, 4294967176
    %v593 = vlaneseq
    %v594 = vshrl.u32 %v593, 7
    %v595 = vsub.s32 %v592, %v594
    %v596 = vrot.slane %v278, %v595
    %vm597 = vcmask 1048512
    %v598 = vsel %vm597, %v596, %v591
    %599 = vst [vmem:[#allocation8] sm:$0x1] %v598
    %v600 = vsub.f32 %v396, %v47
    %v601 = vsub.f32 %v401, %v48
    %v602 = vsub.f32 %v406, %v49
    %v603 = vsub.f32 %v411, %v50
    %v604 = vsub.f32 %v416, %v51
    %v605 = vsub.f32 %v421, %v52
    %v606 = vsub.f32 %v426, %v53
    %v607 = vsub.f32 %v431, %v54
    %v608 = vsub.f32 %v436, %v55
    %v609 = vsub.f32 %v441, %v56
    %v610 = vsub.f32 %v446, %v57
    %v611 = vsub.f32 %v451, %v58
    %v612 = vsub.f32 %v456, %v59
    %v613 = vsub.f32 %v461, %v60
    %v614 = vsub.f32 %v466, %v61
    %v615 = vsub.f32 %v471, %v62
    %v616 = vmul.f32 %v600, %v600
    %v617 = vmul.f32 %v601, %v601
    %v618 = vmul.f32 %v602, %v602
    %v619 = vmul.f32 %v603, %v603
    %v620 = vmul.f32 %v604, %v604
    %v621 = vmul.f32 %v605, %v605
    %v622 = vmul.f32 %v606, %v606
    %v623 = vmul.f32 %v607, %v607
    %v624 = vmul.f32 %v608, %v608
    %v625 = vmul.f32 %v609, %v609
    %v626 = vmul.f32 %v610, %v610
    %v627 = vmul.f32 %v611, %v611
    %v628 = vmul.f32 %v612, %v612
    %v629 = vmul.f32 %v613, %v613
    %v630 = vmul.f32 %v614, %v614
    %v631 = vmul.f32 %v615, %v615
    %v632 = vlaneseq
    %v633 = vshrl.u32 %v632, 7
    %v634 = vadd.s32 %v633, 8
    %v635 = vadd.s32 %v633, 16
    %v636 = vadd.s32 %v633, 24
    %v637 = vadd.s32 %v633, 32
    %v638 = vadd.s32 %v633, 40
    %v639 = vadd.s32 %v633, 48
    %v640 = vadd.s32 %v633, 56
    %v641 = vadd.s32 %v633, 64
    %v642 = vadd.s32 %v633, 72
    %v643 = vadd.s32 %v633, 80
    %v644 = vadd.s32 %v633, 88
    %v645 = vadd.s32 %v633, 96
    %v646 = vadd.s32 %v633, 104
    %v647 = vadd.s32 %v633, 112
    %v648 = vadd.s32 %v633, 120
    %s649 = smul.u32 0, 128
    %v650 = vstv %s649
    %v651 = vadd.s32 %v633, %v650
    %v652 = vadd.s32 %v634, %v650
    %v653 = vadd.s32 %v635, %v650
    %v654 = vadd.s32 %v636, %v650
    %v655 = vadd.s32 %v637, %v650
    %v656 = vadd.s32 %v638, %v650
    %v657 = vadd.s32 %v639, %v650
    %v658 = vadd.s32 %v640, %v650
    %v659 = vadd.s32 %v641, %v650
    %v660 = vadd.s32 %v642, %v650
    %v661 = vadd.s32 %v643, %v650
    %v662 = vadd.s32 %v644, %v650
    %v663 = vadd.s32 %v645, %v650
    %v664 = vadd.s32 %v646, %v650
    %v665 = vadd.s32 %v647, %v650
    %v666 = vadd.s32 %v648, %v650
    %vm667 = vcmp.lt.s32.totalorder %v651, 16
    %vm668 = vcmp.lt.s32.totalorder %v652, 16
    %vm669 = vcmp.lt.s32.totalorder %v653, 16
    %vm670 = vcmp.lt.s32.totalorder %v654, 16
    %vm671 = vcmp.lt.s32.totalorder %v655, 16
    %vm672 = vcmp.lt.s32.totalorder %v656, 16
    %vm673 = vcmp.lt.s32.totalorder %v657, 16
    %vm674 = vcmp.lt.s32.totalorder %v658, 16
    %vm675 = vcmp.lt.s32.totalorder %v659, 16
    %vm676 = vcmp.lt.s32.totalorder %v660, 16
    %vm677 = vcmp.lt.s32.totalorder %v661, 16
    %vm678 = vcmp.lt.s32.totalorder %v662, 16
    %vm679 = vcmp.lt.s32.totalorder %v663, 16
    %vm680 = vcmp.lt.s32.totalorder %v664, 16
    %vm681 = vcmp.lt.s32.totalorder %v665, 16
    %vm682 = vcmp.lt.s32.totalorder %v666, 16
    %v683 = vsel %vm667, 1, 0
    %v684 = vsel %vm668, 1, 0
    %v685 = vsel %vm669, 1, 0
    %v686 = vsel %vm670, 1, 0
    %v687 = vsel %vm671, 1, 0
    %v688 = vsel %vm672, 1, 0
    %v689 = vsel %vm673, 1, 0
    %v690 = vsel %vm674, 1, 0
    %v691 = vsel %vm675, 1, 0
    %v692 = vsel %vm676, 1, 0
    %v693 = vsel %vm677, 1, 0
    %v694 = vsel %vm678, 1, 0
    %v695 = vsel %vm679, 1, 0
    %v696 = vsel %vm680, 1, 0
    %v697 = vsel %vm681, 1, 0
    %v698 = vsel %vm682, 1, 0
    %vm699 = vcmp.eq.s32.totalorder %v683, 1
    %vm700 = vcmp.eq.s32.totalorder %v684, 1
    %vm701 = vcmp.eq.s32.totalorder %v685, 1
    %vm702 = vcmp.eq.s32.totalorder %v686, 1
    %vm703 = vcmp.eq.s32.totalorder %v687, 1
    %vm704 = vcmp.eq.s32.totalorder %v688, 1
    %vm705 = vcmp.eq.s32.totalorder %v689, 1
    %vm706 = vcmp.eq.s32.totalorder %v690, 1
    %vm707 = vcmp.eq.s32.totalorder %v691, 1
    %vm708 = vcmp.eq.s32.totalorder %v692, 1
    %vm709 = vcmp.eq.s32.totalorder %v693, 1
    %vm710 = vcmp.eq.s32.totalorder %v694, 1
    %vm711 = vcmp.eq.s32.totalorder %v695, 1
    %vm712 = vcmp.eq.s32.totalorder %v696, 1
    %vm713 = vcmp.eq.s32.totalorder %v697, 1
    %vm714 = vcmp.eq.s32.totalorder %v698, 1
    %v715 = vsel %vm699, %v616, 0.0
    %v716 = vsel %vm700, %v617, 0.0
    %v717 = vsel %vm701, %v618, 0.0
    %v718 = vsel %vm702, %v619, 0.0
    %v719 = vsel %vm703, %v620, 0.0
    %v720 = vsel %vm704, %v621, 0.0
    %v721 = vsel %vm705, %v622, 0.0
    %v722 = vsel %vm706, %v623, 0.0
    %v723 = vsel %vm707, %v624, 0.0
    %v724 = vsel %vm708, %v625, 0.0
    %v725 = vsel %vm709, %v626, 0.0
    %v726 = vsel %vm710, %v627, 0.0
    %v727 = vsel %vm711, %v628, 0.0
    %v728 = vsel %vm712, %v629, 0.0
    %v729 = vsel %vm713, %v630, 0.0
    %v730 = vsel %vm714, %v631, 0.0
    %v731 = vadd.f32 %v715, %v716
    %v732 = vadd.f32 %v731, %v717
    %v733 = vadd.f32 %v732, %v718
    %v734 = vadd.f32 %v733, %v719
    %v735 = vadd.f32 %v734, %v720
    %v736 = vadd.f32 %v735, %v721
    %v737 = vadd.f32 %v736, %v722
    %v738 = vadd.f32 %v737, %v723
    %v739 = vadd.f32 %v738, %v724
    %v740 = vadd.f32 %v739, %v725
    %v741 = vadd.f32 %v740, %v726
    %v742 = vadd.f32 %v741, %v727
    %v743 = vadd.f32 %v742, %v728
    %v744 = vadd.f32 %v743, %v729
    %v745 = vadd.f32 %v744, %v730
    %746 = vadd.xlane.f32.xlu0 %v745
    %v747 = vpop.xlane.xlu0 %746
    %v748 = vrot.slane %v747, 4
    %v749 = vadd.f32 %v747, %v748
    %v750 = vrot.slane %v749, 2
    %v751 = vadd.f32 %v749, %v750
    %v752 = vrot.slane %v751, 1
    %v753 = vadd.f32 %v751, %v752
    %s754 = vtos %v753
    %v755 = vstv %s754
    %vm756 = vcmask 0
    %757 = vst.msk [vmem:[#allocation10] sm:$0x1] %vm756, %v755
    // Predicated region
    $region22: #{tpu_custom_call.1} parent=1 // pred_check
      _
    $region23: #{tpu_custom_call.1} parent=1 // pred_check_branch
      %759 = sbr.rel (0) target = $region25
    $region24: #{tpu_custom_call.1} parent=1 // pred_region
      %s761 = ssub.s32 2048, 2048
      %762 = vsyncadd [#allocation4], %s761
      %s763 = sshll.u32 [#allocation7], 4
      %s764 = int_to_ptr.vmem [resolvable:$true] %s763
      %769 = dma.vmem_to_hbm [thread:$0]  %s764, 2048, %s3, [#allocation4], 128, 128, 8
    $region25: #{tpu_custom_call.1} parent=1 // pred_fallthru
      _
    // Predicated region
    $region26: #{tpu_custom_call.1} parent=1 // pred_check
      _
    $region27: #{tpu_custom_call.1} parent=1 // pred_check_branch
      %771 = sbr.rel (0) target = $region29
    $region28: #{tpu_custom_call.1} parent=1 // pred_region
      %s773 = ssub.s32 16, 16
      %774 = vsyncadd [#allocation9], %s773
      %s776 = sshll.u32 [#allocation8], 4
      %s777 = int_to_ptr.vmem [resolvable:$true] %s776
      %779 = dma.vmem_to_hbm [thread:$0]  %s777, 16, %s4, [#allocation9]
    $region29: #{tpu_custom_call.1} parent=1 // pred_fallthru
      _
    // Predicated region
    $region30: #{tpu_custom_call.1} parent=1 // pred_check
      _
    $region31: #{tpu_custom_call.1} parent=1 // pred_check_branch
      %781 = sbr.rel (0) target = $region33
    $region32: #{tpu_custom_call.1} parent=1 // pred_region
      %s783 = ssub.s32 16, 16
      %784 = vsyncadd [#allocation9], %s783
      %s786 = sshll.u32 [#allocation10], 4
      %s787 = int_to_ptr.vmem [resolvable:$true] %s786
      %789 = dma.vmem_to_hbm [thread:$0]  %s787, 16, %s5, [#allocation9]
    $region33: #{tpu_custom_call.1} parent=1 // pred_fallthru
      _
    // Predicated region
    $region34: #{tpu_custom_call.1} parent=1 // pred_check
      _
    $region35: #{tpu_custom_call.1} parent=1 // pred_check_branch
      %791 = sbr.rel (0) target = $region37
    $region36: #{tpu_custom_call.1} parent=1 // pred_region
      %792 = dma.done [#allocation4], 2048
    $region37: #{tpu_custom_call.1} parent=1 // pred_fallthru
      _
    // Predicated region
    $region38: #{tpu_custom_call.1} parent=1 // pred_check
      _
    $region39: #{tpu_custom_call.1} parent=1 // pred_check_branch
      %794 = sbr.rel (0) target = $region41
    $region40: #{tpu_custom_call.1} parent=1 // pred_region
      %795 = dma.done [#allocation9], 16
    $region41: #{tpu_custom_call.1} parent=1 // pred_fallthru
      _
    // Predicated region
    $region42: #{tpu_custom_call.1} parent=1 // pred_check
      _
    $region43: #{tpu_custom_call.1} parent=1 // pred_check_branch
      %797 = sbr.rel (0) target = $region45
    $region44: #{tpu_custom_call.1} parent=1 // pred_region
      %798 = dma.done [#allocation9], 16
    $region45: #{tpu_custom_call.1} parent=1 // pred_fallthru
      _
    %799 = vsyncpa [#allocation3], 1
    %800 = vsyncpa [#allocation6], 1
    %801 = vsyncpa [#allocation4], 1
    %802 = vsyncpa [#allocation9], 1

</llo_original>
